<compile_context>
chip_gen: v7x
topology: tpu7x:2x2x1
jax: 0.10.0
libtpu: 0.0.40
codegen_flags: <defaults>
</compile_context>

<pallas_src>
import math

import jax
import jax.numpy as jnp
from jax.experimental import pallas as pl
from jax.experimental.pallas import tpu as pltpu


def _round_up(a: int, m: int) -> int:
    return ((a + m - 1) // m) * m


def _pairwise_bilinear_kernel(x1_ref, w_ref, x2t_ref, bias_ref, o_ref):
    # x1_ref:   (1, tn1, d1)            compute dtype (bf16 or f32)
    # w_ref:    (d1, t_out*d2p)         compute dtype (flattened (d1, out, d2p) slab)
    # x2t_ref:  (1, d2p, n2p)           compute dtype (x2 pre-transposed, zero-padded)
    # bias_ref: (t_out, 1)              float32
    # o_ref:    (1, tn1, t_out, n2p)    float32 (n2p last -> unmasked lane-dense stores)
    tn1 = x1_ref.shape[1]
    d2p = x2t_ref.shape[1]
    n2p = x2t_ref.shape[2]
    t_out = o_ref.shape[2]

    x1 = x1_ref[0]                                            # (tn1, d1)

    # MXU 1: x1W = x1 @ W  -> (tn1, t_out*d2p), f32 accumulation.
    x1w = jnp.dot(x1, w_ref[...], preferred_element_type=jnp.float32)

    # d2p is a multiple of 128 and tn1 a multiple of 8 -> lane-tile aligned reshape.
    x1w = x1w.reshape(tn1 * t_out, d2p).astype(x1.dtype)

    # MXU 2: (tn1*t_out, d2p) @ (d2p, n2p), f32 accumulation.
    s = jnp.dot(x1w, x2t_ref[0], preferred_element_type=jnp.float32)

    # Bias broadcasts over (tn1, n2p); store in (tn1, out, n2) layout (n2 lane-dense).
    y = s.reshape(tn1, t_out, n2p) + bias_ref[...]
    o_ref[0] = y.astype(o_ref.dtype)


def pairwise_bilinear(input1, input2, weight, bias=None, *,
                      compute_dtype=jnp.bfloat16, block_n1=128, block_out=None):
    """input1: (B, n1, d1); input2: (B, n2, d2); weight: (d1, out, d2); bias: (out,).

    Returns (B, n1, n2, out) float32, matching the PyTorch module.
    """
    B, n1, d1 = input1.shape
    B2, n2, d2 = input2.shape
    assert B == B2
    assert weight.shape[0] == d1 and weight.shape[2] == d2
    out_features = weight.shape[1]
    itm = jnp.dtype(compute_dtype).itemsize

    # --- wrapper-side layout prep (plain XLA glue) ---------------------------
    d2p = _round_up(d2, 128)   # contraction dim of 2nd matmul / lane dim of x1W
    n2p = _round_up(n2, 128)   # lane dim of output stores (unmasked vst)
    n1p = _round_up(n1, 8)     # sublane dim of x1 tiles

    # Tile the `out` axis so the (double-buffered) weight slab stays VMEM friendly.
    if block_out is None:
        w_tile_budget = 6 << 20                        # bytes per weight buffer
        if d1 * out_features * d2p * itm <= w_tile_budget:
            block_out = out_features
        else:
            block_out = max(8, int(w_tile_budget // (d1 * d2p * itm)) // 8 * 8)
    if block_out >= out_features:
        t_out, out_p = out_features, out_features      # single (full-extent) tile
    else:
        t_out = _round_up(block_out, 8)                # sublane-aligned tile
        out_p = _round_up(out_features, t_out)

    if n1p != n1:
        input1 = jnp.pad(input1, ((0, 0), (0, n1p - n1), (0, 0)))
    if n2p != n2 or d2p != d2:
        input2 = jnp.pad(input2, ((0, 0), (0, n2p - n2), (0, d2p - d2)))
    if out_p != out_features or d2p != d2:
        weight = jnp.pad(weight, ((0, 0), (0, out_p - out_features), (0, d2p - d2)))

    x1 = input1.astype(compute_dtype)                          # (B, n1p, d1)
    x2_t = jnp.swapaxes(input2, 1, 2).astype(compute_dtype)    # (B, d2p, n2p)
    w_flat = weight.reshape(d1, out_p * d2p).astype(compute_dtype)

    if bias is None:
        bias = jnp.zeros((out_features,), jnp.float32)
    bias_col = jnp.pad(bias.astype(jnp.float32),
                       (0, out_p - out_features)).reshape(out_p, 1)

    # --- grid / tiling --------------------------------------------------------
    tn1 = n1p if n1p <= block_n1 else block_n1
    grid = (B, (n1p + tn1 - 1) // tn1, out_p // t_out)

    # Rough VMEM footprint (double-buffered tiles + f32 intermediates); only raise
    # the scoped limit when actually needed, with headroom under v7x's 64 MiB VMEM.
    vmem_est = (2 * d1 * t_out * d2p * itm              # weight tile (double buffered)
                + 2 * tn1 * d1 * itm                    # x1 tile
                + 2 * d2p * n2p * itm                   # x2^T tile
                + 2 * tn1 * t_out * n2p * 4             # output tile (f32)
                + tn1 * t_out * d2p * (4 + itm)         # x1W intermediate (+ cast)
                + tn1 * t_out * n2p * 4                 # s intermediate (f32)
                + (1 << 15))
    vmem_limit = None
    if vmem_est > (12 << 20):
        vmem_limit = min(int(vmem_est * 1.25), 48 << 20)

    flops = 2 * B * n1p * out_p * d2p * (d1 + n2p)
    bytes_accessed = ((B * n1p * d1 + d1 * out_p * d2p + B * d2p * n2p) * itm
                      + B * n1p * out_p * n2p * 4)
    cost = pl.CostEstimate(flops=flops, transcendentals=0,
                           bytes_accessed=bytes_accessed)

    out_non = pl.pallas_call(
        _pairwise_bilinear_kernel,
        out_shape=jax.ShapeDtypeStruct((B, n1p, out_p, n2p), jnp.float32),
        grid=grid,
        in_specs=[
            pl.BlockSpec((1, tn1, d1), lambda b, i, o: (b, i, 0)),
            pl.BlockSpec((d1, t_out * d2p), lambda b, i, o: (0, o)),
            pl.BlockSpec((1, d2p, n2p), lambda b, i, o: (b, 0, 0)),
            pl.BlockSpec((t_out, 1), lambda b, i, o: (o, 0)),
        ],
        out_specs=pl.BlockSpec((1, tn1, t_out, n2p),
                               lambda b, i, o: (b, i, o, 0)),
        compiler_params=pltpu.CompilerParams(
            dimension_semantics=("parallel", "parallel", "parallel"),
            vmem_limit_bytes=vmem_limit,
        ),
        cost_estimate=cost,
    )(x1, w_flat, x2_t, bias_col)

    # Drop padding and permute to the module's (B, n1, n2, out) layout.
    return jnp.transpose(out_non[:, :n1, :out_features, :n2], (0, 1, 3, 2))


def pairwise_bilinear_ref(input1, input2, weight, bias):
    # Pure-JAX f32 reference for correctness checking.
    y = jnp.einsum("bip,poq,bjq->bijo", input1, weight, input2)
    return y + bias


def _run_case(key, B, n1, n2, d1, d2, out_features, block_out=None):
    k1, k2, kw, kb = jax.random.split(key, 4)
    input1 = jax.random.normal(k1, (B, n1, d1), dtype=jnp.float32)
    input2 = jax.random.normal(k2, (B, n2, d2), dtype=jnp.float32)

    # Parameter init mirroring reset_parameters(): uniform(-bound, bound),
    # bound = 1/sqrt(in1_features).
    bound = 1.0 / math.sqrt(d1)
    weight = jax.random.uniform(kw, (d1, out_features, d2),
                                minval=-bound, maxval=bound, dtype=jnp.float32)
    bias = jax.random.uniform(kb, (out_features,),
                              minval=-bound, maxval=bound, dtype=jnp.float32)

    y_ref = pairwise_bilinear_ref(input1, input2, weight, bias)

    # 1) Strict check of kernel logic: pure-f32 path vs f32 reference.
    y_f32 = jax.block_until_ready(
        pairwise_bilinear(input1, input2, weight, bias,
                          compute_dtype=jnp.float32, block_out=block_out))
    assert y_f32.shape == (B, n1, n2, out_features)
    assert jnp.allclose(y_f32, y_ref, atol=1e-4, rtol=1e-4)

    # 2) Fast path (default): bf16 MXU inputs, f32 accumulation -> relaxed tolerance.
    y_bf16 = jax.block_until_ready(
        pairwise_bilinear(input1, input2, weight, bias, block_out=block_out))
    assert y_bf16.shape == (B, n1, n2, out_features)
    assert jnp.allclose(y_bf16, y_ref, atol=2e-1, rtol=5e-2)


if __name__ == "__main__":
    key = jax.random.PRNGKey(0)
    ka, kb = jax.random.split(key)

    # Small shapes consistent with the module's forward.
    _run_case(ka, B=2, n1=8, n2=8, d1=32, d2=32, out_features=4)

    # Odd / unaligned sizes + forced out-tiling (exercises padding & out grid axis).
    _run_case(kb, B=2, n1=9, n2=10, d1=32, d2=48, out_features=12, block_out=8)

    print("KERNEL_OK")
</pallas_src>

<mosaic_0001>
module attributes {stable_mosaic.version = 11 : i64} {
  func.func @_pairwise_bilinear_kernel(%arg0: i32, %arg1: i32, %arg2: i32, %arg3: memref<1x8x32xf32, #tpu.memory_space<vmem>>, %arg4: memref<32x512xf32, #tpu.memory_space<vmem>>, %arg5: memref<1x128x128xf32, #tpu.memory_space<vmem>>, %arg6: memref<4x1xf32, #tpu.memory_space<vmem>>, %arg7: memref<1x8x4x128xf32, #tpu.memory_space<vmem>>) attributes {dimension_semantics = [#tpu.dimension_semantics<parallel>, #tpu.dimension_semantics<parallel>, #tpu.dimension_semantics<parallel>], iteration_bounds = array<i64: 2, 1, 1>, scalar_prefetch = 0 : i64, scratch_operands = 0 : i64, tpu.core_type = #tpu.core_type<tc>, window_params = [{transform_indices = @transform_0, window_bounds = array<i64: 1, 8, 32>}, {transform_indices = @transform_1, window_bounds = array<i64: 32, 512>}, {transform_indices = @transform_2, window_bounds = array<i64: 1, 128, 128>}, {transform_indices = @transform_3, window_bounds = array<i64: 4, 1>}, {transform_indices = @transform_4, window_bounds = array<i64: 1, 8, 4, 128>}]} {
    %c0 = arith.constant 0 : index
    %c0_0 = arith.constant 0 : index
    %c0_1 = arith.constant 0 : index
    %0 = vector.load %arg3[%c0, %c0_0, %c0_1] : memref<1x8x32xf32, #tpu.memory_space<vmem>>, vector<1x8x32xf32>
    %1 = vector.shape_cast %0 : vector<1x8x32xf32> to vector<8x32xf32>
    %c0_2 = arith.constant 0 : index
    %c0_3 = arith.constant 0 : index
    %2 = vector.load %arg4[%c0_2, %c0_3] : memref<32x512xf32, #tpu.memory_space<vmem>>, vector<32x512xf32>
    %cst = arith.constant dense<0.000000e+00> : vector<8x512xf32>
    %3 = tpu.matmul %1, %2, %cst {dimension_numbers = #tpu.dot_dimension_numbers<[1], [0], [0], [1], [0, 0, 1, 1], [], []>} : vector<8x32xf32>, vector<32x512xf32>, vector<8x512xf32> -> vector<8x512xf32>
    %4 = vector.shape_cast %3 : vector<8x512xf32> to vector<32x128xf32>
    %c0_4 = arith.constant 0 : index
    %c0_5 = arith.constant 0 : index
    %c0_6 = arith.constant 0 : index
    %5 = vector.load %arg5[%c0_4, %c0_5, %c0_6] : memref<1x128x128xf32, #tpu.memory_space<vmem>>, vector<1x128x128xf32>
    %6 = vector.shape_cast %5 : vector<1x128x128xf32> to vector<128x128xf32>
    %cst_7 = arith.constant dense<0.000000e+00> : vector<32x128xf32>
    %7 = tpu.matmul %4, %6, %cst_7 {dimension_numbers = #tpu.dot_dimension_numbers<[1], [0], [0], [1], [0, 0, 1, 1], [], []>} : vector<32x128xf32>, vector<128x128xf32>, vector<32x128xf32> -> vector<32x128xf32>
    %8 = vector.shape_cast %7 : vector<32x128xf32> to vector<8x4x128xf32>
    %c0_8 = arith.constant 0 : index
    %c0_9 = arith.constant 0 : index
    %9 = vector.load %arg6[%c0_8, %c0_9] : memref<4x1xf32, #tpu.memory_space<vmem>>, vector<4x1xf32>
    %10 = vector.shape_cast %9 : vector<4x1xf32> to vector<1x4x1xf32>
    %11 = vector.broadcast %10 : vector<1x4x1xf32> to vector<8x4x128xf32>
    %12 = arith.addf %8, %11 : vector<8x4x128xf32>
    %c0_10 = arith.constant 0 : index
    %c0_11 = arith.constant 0 : index
    %c0_12 = arith.constant 0 : index
    %c0_13 = arith.constant 0 : index
    %13 = vector.load %arg7[%c0_10, %c0_11, %c0_12, %c0_13] : memref<1x8x4x128xf32, #tpu.memory_space<vmem>>, vector<1x8x4x128xf32>
    %14 = vector.shape_cast %13 : vector<1x8x4x128xf32> to vector<8x4x128xf32>
    %15 = vector.shape_cast %12 : vector<8x4x128xf32> to vector<1x8x4x128xf32>
    tpu.vector_store %arg7[%c0_10, %c0_11, %c0_12, %c0_13], %15 {strides = array<i32>} : memref<1x8x4x128xf32, #tpu.memory_space<vmem>>, vector<1x8x4x128xf32>,
    return
  }
  func.func @transform_0(%arg0: i32, %arg1: i32, %arg2: i32) -> (i32, i32, i32) {
    %c0_i32 = arith.constant 0 : i32
    %c0_i32_0 = arith.constant 0 : i32
    return %arg0, %arg1, %c0_i32 : i32, i32, i32
  }
  func.func @transform_1(%arg0: i32, %arg1: i32, %arg2: i32) -> (i32, i32) {
    %c0_i32 = arith.constant 0 : i32
    %c0_i32_0 = arith.constant 0 : i32
    return %c0_i32, %arg2 : i32, i32
  }
  func.func @transform_2(%arg0: i32, %arg1: i32, %arg2: i32) -> (i32, i32, i32) {
    %c0_i32 = arith.constant 0 : i32
    %c0_i32_0 = arith.constant 0 : i32
    %c0_i32_1 = arith.constant 0 : i32
    return %arg0, %c0_i32, %c0_i32_0 : i32, i32, i32
  }
  func.func @transform_3(%arg0: i32, %arg1: i32, %arg2: i32) -> (i32, i32) {
    %c0_i32 = arith.constant 0 : i32
    %c0_i32_0 = arith.constant 0 : i32
    return %arg2, %c0_i32 : i32, i32
  }
  func.func @transform_4(%arg0: i32, %arg1: i32, %arg2: i32) -> (i32, i32, i32, i32) {
    %c0_i32 = arith.constant 0 : i32
    %c0_i32_0 = arith.constant 0 : i32
    return %arg0, %arg1, %arg2, %c0_i32 : i32, i32, i32, i32
  }
}

</mosaic_0001>

<llo_original>
// kernel: tpu_custom_call.1
$region0: #{tpu_custom_call.1}
  #allocation0 [shape = 'u32[]', space=smem, size = 0x4, offset = 0x4, fixed_abs, tag = 'smem constant byte address 0x4 - core index']
  #allocation1 [shape = 'u32[144,128]{1,0:T(1,128)}', space=vmem, size = 0x12000, scoped, tag = 'internal scratch']
  %s0 = inlined_call_operand.hbm [shape: f32[2,8,32], index: 0, kind: input, shape index: {}]
  %s1 = inlined_call_operand.hbm [shape: f32[32,512], index: 1, kind: input, shape index: {}]
  %s2 = inlined_call_operand.hbm [shape: f32[2,128,128], index: 2, kind: input, shape index: {}]
  %s3 = inlined_call_operand.vmem [shape: f32[4,1], index: 3, kind: input, shape index: {}]
  %s4 = inlined_call_operand.hbm [shape: f32[2,8,4,128], index: 4, kind: output, shape index: {}]
  %s5 = sld [smem:[#allocation0]]
  $region61: #{tpu_custom_call.1} parent=0
    _
  %s7 = ssub.s32 1, %s5
  %s8 = scalar_select 0, %s7, %s5
  $region1: #{tpu_custom_call.1} parent=0
    #allocation2 [shape = 'u8[8192]{0}', space=vmem, size = 0x2000, scoped, tag = 'input window, operand 0']
    #allocation3 [shape = 's32[2]{0}', space=sflag, size = 0x8, scoped, tag = 'scoped memory for tpu_custom_call.1']
    #allocation4 [shape = 's32[2]{0}', space=sflag, size = 0x8, scoped, tag = 'scoped memory for tpu_custom_call.1']
    #allocation5 [shape = 'u8[65536]{0}', space=vmem, size = 0x10000, scoped, tag = 'input window, operand 1, single buffered']
    #allocation6 [shape = 's32[1]{0}', space=sflag, size = 0x4, scoped, tag = 'scoped memory for tpu_custom_call.1']
    #allocation7 [shape = 'u8[131072]{0}', space=vmem, size = 0x20000, scoped, tag = 'input window, operand 2']
    #allocation8 [shape = 'u8[32768]{0}', space=vmem, size = 0x8000, scoped, tag = 'output window, operand 0']
    %9 = vsyncpa [#allocation3], 0
    %s10 = scalar_lea.sflag [#allocation3], 1
    %11 = vsyncpa %s10, 0
    %12 = vsyncpa [#allocation6], 0
    %13 = vsyncpa [#allocation4], 0
    %s14 = scalar_lea.sflag [#allocation4], 1
    %15 = vsyncpa %s14, 0
    loop: start=0, step=1, limit=4
    $region2: #{tpu_custom_call.1} parent=1 // loop_pre_header
      _
    $region3: #{tpu_custom_call.1} parent=1 // loop_header
      %s17 = sphi 0, %s21
      %p18 = scmp.ge.s32.totalorder %s17, 4
      %s24 = sphi 0, %s43
      %s25 = sphi 0, %s39
      %s26 = sphi 0, %s35
      %s27 = sphi 0, %s24
      %s28 = sphi 0, %s25
      %s29 = sphi 0, %s26
      %s30 = sphi 0, %s27
      %s31 = sphi 0, %s28
      %s32 = sphi 0, %s29
      %s48 = sphi 0, %s50
      %s51 = sphi 0, %s48
      %s52 = sphi 0, %s51
      %s68 = sphi 0, %s52
      %s74 = sphi 0, %s76
      %s77 = sphi 0, %s74
      %s78 = sphi 0, %s77
      %s94 = sphi 0, %s78
      %s100 = sphi 0, %s102
      %s103 = sphi 0, %s100
      %s104 = sphi 0, %s103
      %s120 = sphi 0, %s104
      %s126 = sphi 0, %s128
      %s129 = sphi 0, %s126
      %s130 = sphi 0, %s129
      %s146 = sphi 0, %s130
      %s156 = sphi 0, %s158
      %s159 = sphi 0, %s156
      %s160 = sphi 0, %s159
      %s176 = sphi 0, %s160
    $region4: #{tpu_custom_call.1} parent=1 // loop_header_branch
      %20 = sbr.rel (%p18) target = $region8
    $region5: #{tpu_custom_call.1} parent=1 // loop_body
      %s22 = ssub.s32 %s17, 1
      %s23 = ssub.s32 %s17, 2
      %s33 = sadd.s32 1, %s26
      %p34 = scmp.ge.s32.totalorder %s33, 1
      %s35 = scalar_select %p34, 0, %s33
      %s36 = sadd.s32 1, %s25
      %s37 = scalar_select %p34, %s36, %s25
      %p38 = scmp.ge.s32.totalorder %s37, 1
      %s39 = scalar_select %p38, 0, %s37
      %s40 = sadd.s32 1, %s24
      %s41 = scalar_select %p38, %s40, %s24
      %p42 = scmp.ge.s32.totalorder %s41, 2
      %s43 = scalar_select %p42, 0, %s41
      %s44 = ssub.s32 %s24, %s43
      %s45 = ssub.s32 %s25, %s39
      %s46 = sor.u32 %s44, %s45
      %p47 = scmp.eq.s32.totalorder %s46, 0
      %s49 = sadd.s32 %s48, 1
      %s50 = scalar_select %p47, %s48, %s49
      %p53 = pneg %p47
      %p54 = scmp.eq.s32.totalorder %s17, 1
      %p55 = por %p53, %p54
      %p56 = scmp.ne.s32.totalorder %s48, %s51
      %p57 = scmp.eq.s32.totalorder %s17, 0
      %p58 = por %p56, %p57
      %p59 = scmp.ne.s32.totalorder %s48, %s51
      %p60 = scmp.eq.s32.totalorder %s22, 1
      %p61 = por %p59, %p60
      %p62 = scmp.ne.s32.totalorder %s51, %s52
      %p63 = scmp.eq.s32.totalorder %s22, 0
      %p64 = por %p62, %p63
      %p65 = scmp.ne.s32.totalorder %s51, %s52
      %p66 = scmp.eq.s32.totalorder %s23, 1
      %p67 = por %p65, %p66
      %p69 = scmp.ne.s32.totalorder %s52, %s68
      %p70 = scmp.eq.s32.totalorder %s23, 0
      %p71 = por %p69, %p70
      %s72 = ssub.s32 %s26, %s35
      %p73 = scmp.eq.s32.totalorder %s72, 0
      %s75 = sadd.s32 %s74, 1
      %s76 = scalar_select %p73, %s74, %s75
      %p79 = pneg %p73
      %p80 = scmp.eq.s32.totalorder %s17, 1
      %p81 = por %p79, %p80
      %p82 = scmp.ne.s32.totalorder %s74, %s77
      %p83 = scmp.eq.s32.totalorder %s17, 0
      %p84 = por %p82, %p83
      %p85 = scmp.ne.s32.totalorder %s74, %s77
      %p86 = scmp.eq.s32.totalorder %s22, 1
      %p87 = por %p85, %p86
      %p88 = scmp.ne.s32.totalorder %s77, %s78
      %p89 = scmp.eq.s32.totalorder %s22, 0
      %p90 = por %p88, %p89
      %p91 = scmp.ne.s32.totalorder %s77, %s78
      %p92 = scmp.eq.s32.totalorder %s23, 1
      %p93 = por %p91, %p92
      %p95 = scmp.ne.s32.totalorder %s78, %s94
      %p96 = scmp.eq.s32.totalorder %s23, 0
      %p97 = por %p95, %p96
      %s98 = ssub.s32 %s24, %s43
      %p99 = scmp.eq.s32.totalorder %s98, 0
      %s101 = sadd.s32 %s100, 1
      %s102 = scalar_select %p99, %s100, %s101
      %p105 = pneg %p99
      %p106 = scmp.eq.s32.totalorder %s17, 1
      %p107 = por %p105, %p106
      %p108 = scmp.ne.s32.totalorder %s100, %s103
      %p109 = scmp.eq.s32.totalorder %s17, 0
      %p110 = por %p108, %p109
      %p111 = scmp.ne.s32.totalorder %s100, %s103
      %p112 = scmp.eq.s32.totalorder %s22, 1
      %p113 = por %p111, %p112
      %p114 = scmp.ne.s32.totalorder %s103, %s104
      %p115 = scmp.eq.s32.totalorder %s22, 0
      %p116 = por %p114, %p115
      %p117 = scmp.ne.s32.totalorder %s103, %s104
      %p118 = scmp.eq.s32.totalorder %s23, 1
      %p119 = por %p117, %p118
      %p121 = scmp.ne.s32.totalorder %s104, %s120
      %p122 = scmp.eq.s32.totalorder %s23, 0
      %p123 = por %p121, %p122
      %s124 = ssub.s32 %s26, %s35
      %p125 = scmp.eq.s32.totalorder %s124, 0
      %s127 = sadd.s32 %s126, 1
      %s128 = scalar_select %p125, %s126, %s127
      %p131 = pneg %p125
      %p132 = scmp.eq.s32.totalorder %s17, 1
      %p133 = por %p131, %p132
      %p134 = scmp.ne.s32.totalorder %s126, %s129
      %p135 = scmp.eq.s32.totalorder %s17, 0
      %p136 = por %p134, %p135
      %p137 = scmp.ne.s32.totalorder %s126, %s129
      %p138 = scmp.eq.s32.totalorder %s22, 1
      %p139 = por %p137, %p138
      %p140 = scmp.ne.s32.totalorder %s129, %s130
      %p141 = scmp.eq.s32.totalorder %s22, 0
      %p142 = por %p140, %p141
      %p143 = scmp.ne.s32.totalorder %s129, %s130
      %p144 = scmp.eq.s32.totalorder %s23, 1
      %p145 = por %p143, %p144
      %p147 = scmp.ne.s32.totalorder %s130, %s146
      %p148 = scmp.eq.s32.totalorder %s23, 0
      %p149 = por %p147, %p148
      %s150 = ssub.s32 %s24, %s43
      %s151 = ssub.s32 %s25, %s39
      %s152 = sor.u32 %s150, %s151
      %s153 = ssub.s32 %s26, %s35
      %s154 = sor.u32 %s152, %s153
      %p155 = scmp.eq.s32.totalorder %s154, 0
      %s157 = sadd.s32 %s156, 1
      %s158 = scalar_select %p155, %s156, %s157
      %p161 = pneg %p155
      %p162 = scmp.eq.s32.totalorder %s17, 1
      %p163 = por %p161, %p162
      %p164 = scmp.ne.s32.totalorder %s156, %s159
      %p165 = scmp.eq.s32.totalorder %s17, 0
      %p166 = por %p164, %p165
      %p167 = scmp.ne.s32.totalorder %s156, %s159
      %p168 = scmp.eq.s32.totalorder %s22, 1
      %p169 = por %p167, %p168
      %p170 = scmp.ne.s32.totalorder %s159, %s160
      %p171 = scmp.eq.s32.totalorder %s22, 0
      %p172 = por %p170, %p171
      %p173 = scmp.ne.s32.totalorder %s159, %s160
      %p174 = scmp.eq.s32.totalorder %s23, 1
      %p175 = por %p173, %p174
      %p177 = scmp.ne.s32.totalorder %s160, %s176
      %p178 = scmp.eq.s32.totalorder %s23, 0
      %p179 = por %p177, %p178
      %p180 = scmp.le.s32.totalorder 1, %s17
      %p181 = scmp.lt.s32.totalorder %s17, 3
      %p182 = pnand %p180, %p181
      %p183 = pneg %p182
      // Predicated region
      $region9: #{tpu_custom_call.1} parent=5 // pred_check
        _
      $region10: #{tpu_custom_call.1} parent=5 // pred_check_branch
        %185 = sbr.rel (%p182) target = $region12
      $region11: #{tpu_custom_call.1} parent=5 // pred_region
        %s186 = ssub.s32 %s17, 1
        // Predicated region
        $region13: #{tpu_custom_call.1} parent=11 // pred_check
          %p187 = pneg %p90
        $region14: #{tpu_custom_call.1} parent=11 // pred_check_branch
          %189 = sbr.rel (%p187) target = $region16
        $region15: #{tpu_custom_call.1} parent=11 // pred_region
          %s190 = smul.u32 4, %s29
          %s192 = ssub.s32 2048, 2048
          %193 = vsyncadd [#allocation6], %s192
          %s194 = smul.addr %s190, 128
          %s195 = scalar_lea.hbm %s1, %s194
          %s196 = sshll.u32 [#allocation5], 4
          %s197 = int_to_ptr.vmem [resolvable:$true] %s196
          %202 = dma.hbm_to_vmem [thread:$0]  %s195, 2048, %s197, [#allocation6], 512, 512, 32
        $region16: #{tpu_custom_call.1} parent=11 // pred_fallthru
          _
        // Predicated region
        $region17: #{tpu_custom_call.1} parent=11 // pred_check
          %p203 = pneg %p142
        $region18: #{tpu_custom_call.1} parent=11 // pred_check_branch
          %205 = sbr.rel (%p203) target = $region20
        $region19: #{tpu_custom_call.1} parent=11 // pred_region
          %p206 = scmp.lt.s32.totalorder %s29, 0
          %s207 = scalar_select %p206, %s29, 0
          %s208 = smul.addr %s207, 4
          %s209 = scalar_lea.vmem %s3, %s208
        $region20: #{tpu_custom_call.1} parent=11 // pred_fallthru
          _
      $region12: #{tpu_custom_call.1} parent=5 // pred_fallthru
        _
      %p210 = scmp.lt.s32.totalorder %s17, 2
      // Predicated region
      $region21: #{tpu_custom_call.1} parent=5 // pred_check
        %p211 = pneg %p210
      $region22: #{tpu_custom_call.1} parent=5 // pred_check_branch
        %213 = sbr.rel (%p211) target = $region24
      $region23: #{tpu_custom_call.1} parent=5 // pred_region
        // Predicated region
        $region25: #{tpu_custom_call.1} parent=23 // pred_check
          %p214 = pneg %p58
        $region26: #{tpu_custom_call.1} parent=23 // pred_check_branch
          %216 = sbr.rel (%p214) target = $region28
        $region27: #{tpu_custom_call.1} parent=23 // pred_region
          %s217 = sand.u32 %s17, 1
          %s218 = scalar_lea.sflag [#allocation3], %s217
          %s219 = sand.u32 %s48, 1
          %s220 = smul.addr %s219, 8
          %s221 = scalar_lea.vmem [#allocation2], %s220
          %s223 = ssub.s32 128, 128
          %224 = vsyncadd %s218, %s223
          %s225 = sadd.s32 %s25, %s24
          %s226 = smul.addr %s225, 128
          %s227 = scalar_lea.hbm %s0, %s226
          %s229 = sshll.u32 %s221, 4
          %s230 = int_to_ptr.vmem [resolvable:$true] %s229
          %232 = dma.hbm_to_vmem [thread:$0]  %s227, 128, %s230, %s218
        $region28: #{tpu_custom_call.1} parent=23 // pred_fallthru
          _
        // Predicated region
        $region29: #{tpu_custom_call.1} parent=23 // pred_check
          %p233 = pneg %p110
        $region30: #{tpu_custom_call.1} parent=23 // pred_check_branch
          %235 = sbr.rel (%p233) target = $region32
        $region31: #{tpu_custom_call.1} parent=23 // pred_region
          %s236 = sand.u32 %s17, 1
          %s237 = scalar_lea.sflag [#allocation3], %s236
          %s238 = sand.u32 %s100, 1
          %s239 = smul.addr %s238, 128
          %s240 = scalar_lea.vmem [#allocation7], %s239
          %s242 = ssub.s32 2048, 2048
          %243 = vsyncadd %s237, %s242
          %s244 = smul.addr %s24, 16
          %s245 = smul.addr %s244, 128
          %s246 = scalar_lea.hbm %s2, %s245
          %s247 = sshll.u32 %s240, 4
          %s248 = int_to_ptr.vmem [resolvable:$true] %s247
          %253 = dma.hbm_to_vmem [thread:$0]  %s246, 2048, %s248, %s237, 128, 128, 8
        $region32: #{tpu_custom_call.1} parent=23 // pred_fallthru
          _
      $region24: #{tpu_custom_call.1} parent=5 // pred_fallthru
        _
      %p254 = scmp.le.s32.totalorder 1, %s17
      %p255 = scmp.lt.s32.totalorder %s17, 3
      %p256 = pnand %p254, %p255
      %p257 = pneg %p256
      // Predicated region
      $region33: #{tpu_custom_call.1} parent=5 // pred_check
        _
      $region34: #{tpu_custom_call.1} parent=5 // pred_check_branch
        %259 = sbr.rel (%p256) target = $region36
      $region35: #{tpu_custom_call.1} parent=5 // pred_region
        %s260 = ssub.s32 %s17, 1
        %s261 = sand.u32 %s22, 1
        %s262 = scalar_lea.sflag [#allocation3], %s261
        %s263 = sand.u32 %s51, 1
        %s264 = smul.addr %s263, 8
        %s265 = scalar_lea.vmem [#allocation2], %s264
        // Predicated region
        $region37: #{tpu_custom_call.1} parent=35 // pred_check
          %p266 = pneg %p64
        $region38: #{tpu_custom_call.1} parent=35 // pred_check_branch
          %268 = sbr.rel (%p266) target = $region40
        $region39: #{tpu_custom_call.1} parent=35 // pred_region
          %269 = dma.done %s262, 128
        $region40: #{tpu_custom_call.1} parent=35 // pred_fallthru
          _
        // Predicated region
        $region41: #{tpu_custom_call.1} parent=35 // pred_check
          %p270 = pneg %p90
        $region42: #{tpu_custom_call.1} parent=35 // pred_check_branch
          %272 = sbr.rel (%p270) target = $region44
        $region43: #{tpu_custom_call.1} parent=35 // pred_region
          %273 = dma.done [#allocation6], 2048
        $region44: #{tpu_custom_call.1} parent=35 // pred_fallthru
          _
        %s274 = sand.u32 %s22, 1
        %s275 = scalar_lea.sflag [#allocation3], %s274
        %s276 = sand.u32 %s103, 1
        %s277 = smul.addr %s276, 128
        %s278 = scalar_lea.vmem [#allocation7], %s277
        // Predicated region
        $region45: #{tpu_custom_call.1} parent=35 // pred_check
          %p279 = pneg %p116
        $region46: #{tpu_custom_call.1} parent=35 // pred_check_branch
          %281 = sbr.rel (%p279) target = $region48
        $region47: #{tpu_custom_call.1} parent=35 // pred_region
          %282 = dma.done %s275, 2048
        $region48: #{tpu_custom_call.1} parent=35 // pred_fallthru
          _
        %s283 = sand.u32 %s22, 1
        %s284 = scalar_lea.sflag [#allocation3], %s283
        %s285 = sand.u32 %s51, 1
        %s286 = smul.addr %s285, 8
        %s287 = scalar_lea.vmem [#allocation2], %s286
        %p288 = pneg %p64
        %p289 = pneg %p61
        %p290 = pneg %p90
        %p291 = pneg %p87
        %s292 = sand.u32 %s22, 1
        %s293 = scalar_lea.sflag [#allocation3], %s292
        %s294 = sand.u32 %s103, 1
        %s295 = smul.addr %s294, 128
        %s296 = scalar_lea.vmem [#allocation7], %s295
        %p297 = pneg %p116
        %p298 = pneg %p113
        %p299 = scmp.lt.s32.totalorder %s29, 0
        %s300 = scalar_select %p299, %s29, 0
        %s301 = smul.addr %s300, 4
        %s302 = scalar_lea.vmem %s3, %s301
        %p303 = pneg %p142
        %p304 = pneg %p139
        %p305 = pneg %p172
        %p306 = pneg %p169
        %s307 = sand.u32 %s159, 1
        %s308 = scalar_lea.sflag [#allocation4], %s307
        %s309 = sand.u32 %s159, 1
        %s310 = smul.addr %s309, 32
        %s311 = scalar_lea.vmem [#allocation8], %s310
        %s312 = smul.u32 4, %s29
        %p313 = scmp.lt.s32.totalorder %s29, 0
        %s314 = scalar_select %p313, %s29, 0
        %s315 = smul.addr %s314, 4
        %s316 = scalar_lea.vmem %s3, %s315
        %s317 = smul.u32 8, %s28
        %v318 = vld [vmem:[%s265] sm:$0xff]
        %v319 = vld [vmem:[#allocation5] sm:$0xff]
        %v320 = vld [vmem:[#allocation5 + $0x8] sm:$0xff]
        %v321 = vld [vmem:[#allocation5 + $0x10] sm:$0xff]
        %v322 = vld [vmem:[#allocation5 + $0x18] sm:$0xff]
        %v323 = vld [vmem:[#allocation5 + $0x20] sm:$0xff]
        %v324 = vld [vmem:[#allocation5 + $0x28] sm:$0xff]
        %v325 = vld [vmem:[#allocation5 + $0x30] sm:$0xff]
        %v326 = vld [vmem:[#allocation5 + $0x38] sm:$0xff]
        %v327 = vld [vmem:[#allocation5 + $0x40] sm:$0xff]
        %v328 = vld [vmem:[#allocation5 + $0x48] sm:$0xff]
        %v329 = vld [vmem:[#allocation5 + $0x50] sm:$0xff]
        %v330 = vld [vmem:[#allocation5 + $0x58] sm:$0xff]
        %v331 = vld [vmem:[#allocation5 + $0x60] sm:$0xff]
        %v332 = vld [vmem:[#allocation5 + $0x68] sm:$0xff]
        %v333 = vld [vmem:[#allocation5 + $0x70] sm:$0xff]
        %v334 = vld [vmem:[#allocation5 + $0x78] sm:$0xff]
        %vm335 = vcmask 261120
        %v337 = vsel %vm335, %v318, 0
        %339 = vmatprep.subr.mxu0 %v320
        %340 = vmatpush1.msra.mxu0 %v319
        %341 = vmatprep.subr.mxu0 %v324
        %342 = vmatpush1.msra.mxu0 %v323
        %343 = vmatprep.subr.mxu0 %v328
        %344 = vmatpush1.msra.mxu0 %v327
        %345 = vmatprep.subr.mxu0 %v332
        %346 = vmatpush1.msra.mxu0 %v331
        %347 = vmatprep.subr.mxu0 0.0
        %348 = vmatpush1.msra.mxu0 0.0
        %349 = vmatprep.subr.mxu0 0.0
        %350 = vmatpush1.msra.mxu0 0.0
        %351 = vmatprep.subr.mxu0 0.0
        %352 = vmatpush1.msra.mxu0 0.0
        %353 = vmatprep.subr.mxu0 0.0
        %354 = vmatpush1.msra.mxu0 0.0
        %355 = vmatprep.subr.mxu0 0.0
        %356 = vmatpush1.msra.mxu0 0.0
        %357 = vmatprep.subr.mxu0 0.0
        %358 = vmatpush1.msra.mxu0 0.0
        %359 = vmatprep.subr.mxu0 0.0
        %360 = vmatpush1.msra.mxu0 0.0
        %361 = vmatprep.subr.mxu0 0.0
        %362 = vmatpush1.msra.mxu0 0.0
        %363 = vmatprep.subr.mxu0 0.0
        %364 = vmatpush1.msra.mxu0 0.0
        %365 = vmatprep.subr.mxu0 0.0
        %366 = vmatpush1.msra.mxu0 0.0
        %367 = vmatprep.subr.mxu0 0.0
        %368 = vmatpush1.msra.mxu0 0.0
        %369 = vmatprep.subr.mxu0 0.0
        %370 = vmatpush1.msra.mxu0 0.0
        %371 = vmatprep.subr.mxu0 0.0
        %372 = vmatpush1.msra.mxu0 0.0
        %373 = vmatprep.subr.mxu0 0.0
        %374 = vmatpush1.msra.mxu0 0.0
        %375 = vmatprep.subr.mxu0 0.0
        %376 = vmatpush1.msra.mxu0 0.0
        %377 = vmatprep.subr.mxu0 0.0
        %378 = vmatpush1.msra.mxu0 0.0
        %379 = vmatprep.subr.mxu0 0.0
        %380 = vmatpush1.msra.mxu0 0.0
        %381 = vmatprep.subr.mxu0 0.0
        %382 = vmatpush1.msra.mxu0 0.0
        %383 = vmatprep.subr.mxu0 0.0
        %384 = vmatpush1.msra.mxu0 0.0
        %385 = vmatprep.subr.mxu0 0.0
        %386 = vmatpush1.msra.mxu0 0.0
        %387 = vmatprep.subr.mxu0 0.0
        %388 = vmatpush1.msra.mxu0 0.0
        %389 = vmatprep.subr.mxu0 0.0
        %390 = vmatpush1.msra.mxu0 0.0
        %391 = vmatprep.subr.mxu0 0.0
        %392 = vmatpush1.msra.mxu0 0.0
        %393 = vmatprep.subr.mxu0 0.0
        %394 = vmatpush1.msra.mxu0 0.0
        %395 = vmatprep.subr.mxu0 0.0
        %396 = vmatpush1.msra.mxu0 0.0
        %397 = vmatprep.subr.mxu0 0.0
        %398 = vmatpush1.msra.mxu0 0.0
        %399 = vmatprep.subr.mxu0 0.0
        %400 = vmatpush1.msra.mxu0 0.0
        %401 = vmatprep.subr.mxu0 0.0
        %402 = vmatpush1.msra.mxu0 0.0
        %403 = vmatprep.mubr.f32.mxu0 0.0
        %404 = vmatmul.mubr.f32.gmra.mrb[0].mxu0 %v337
        %v405 = vpop.f32.mrb[0].mxu0
        %v406 = vadd.f32 0.0, %v405
        %v407 = vpop.f32.mrb[0].mxu0
        %v408 = vadd.f32 0.0, %v407
        %409 = vdwg.mxu0
        %410 = vmatprep.subr.mxu0 %v322
        %411 = vmatpush1.msra.mxu0 %v321
        %412 = vmatprep.subr.mxu0 %v326
        %413 = vmatpush1.msra.mxu0 %v325
        %414 = vmatprep.subr.mxu0 %v330
        %415 = vmatpush1.msra.mxu0 %v329
        %416 = vmatprep.subr.mxu0 %v334
        %417 = vmatpush1.msra.mxu0 %v333
        %418 = vmatprep.subr.mxu0 0.0
        %419 = vmatpush1.msra.mxu0 0.0
        %420 = vmatprep.subr.mxu0 0.0
        %421 = vmatpush1.msra.mxu0 0.0
        %422 = vmatprep.subr.mxu0 0.0
        %423 = vmatpush1.msra.mxu0 0.0
        %424 = vmatprep.subr.mxu0 0.0
        %425 = vmatpush1.msra.mxu0 0.0
        %426 = vmatprep.subr.mxu0 0.0
        %427 = vmatpush1.msra.mxu0 0.0
        %428 = vmatprep.subr.mxu0 0.0
        %429 = vmatpush1.msra.mxu0 0.0
        %430 = vmatprep.subr.mxu0 0.0
        %431 = vmatpush1.msra.mxu0 0.0
        %432 = vmatprep.subr.mxu0 0.0
        %433 = vmatpush1.msra.mxu0 0.0
        %434 = vmatprep.subr.mxu0 0.0
        %435 = vmatpush1.msra.mxu0 0.0
        %436 = vmatprep.subr.mxu0 0.0
        %437 = vmatpush1.msra.mxu0 0.0
        %438 = vmatprep.subr.mxu0 0.0
        %439 = vmatpush1.msra.mxu0 0.0
        %440 = vmatprep.subr.mxu0 0.0
        %441 = vmatpush1.msra.mxu0 0.0
        %442 = vmatprep.subr.mxu0 0.0
        %443 = vmatpush1.msra.mxu0 0.0
        %444 = vmatprep.subr.mxu0 0.0
        %445 = vmatpush1.msra.mxu0 0.0
        %446 = vmatprep.subr.mxu0 0.0
        %447 = vmatpush1.msra.mxu0 0.0
        %448 = vmatprep.subr.mxu0 0.0
        %449 = vmatpush1.msra.mxu0 0.0
        %450 = vmatprep.subr.mxu0 0.0
        %451 = vmatpush1.msra.mxu0 0.0
        %452 = vmatprep.subr.mxu0 0.0
        %453 = vmatpush1.msra.mxu0 0.0
        %454 = vmatprep.subr.mxu0 0.0
        %455 = vmatpush1.msra.mxu0 0.0
        %456 = vmatprep.subr.mxu0 0.0
        %457 = vmatpush1.msra.mxu0 0.0
        %458 = vmatprep.subr.mxu0 0.0
        %459 = vmatpush1.msra.mxu0 0.0
        %460 = vmatprep.subr.mxu0 0.0
        %461 = vmatpush1.msra.mxu0 0.0
        %462 = vmatprep.subr.mxu0 0.0
        %463 = vmatpush1.msra.mxu0 0.0
        %464 = vmatprep.subr.mxu0 0.0
        %465 = vmatpush1.msra.mxu0 0.0
        %466 = vmatprep.subr.mxu0 0.0
        %467 = vmatpush1.msra.mxu0 0.0
        %468 = vmatprep.subr.mxu0 0.0
        %469 = vmatpush1.msra.mxu0 0.0
        %470 = vmatprep.subr.mxu0 0.0
        %471 = vmatpush1.msra.mxu0 0.0
        %472 = vmatprep.subr.mxu0 0.0
        %473 = vmatpush1.msra.mxu0 0.0
        %474 = vmatprep.mubr.f32.mxu0 0.0
        %475 = vmatmul.mubr.f32.gmra.mrb[0].mxu0 %v337
        %v476 = vpop.f32.mrb[0].mxu0
        %v477 = vadd.f32 0.0, %v476
        %v478 = vpop.f32.mrb[0].mxu0
        %v479 = vadd.f32 0.0, %v478
        %480 = vdwg.mxu0
        %v485 = vcombine.low %v406, %v408
        %v486 = vcombine.high %v406, %v408
        %v487 = vcombine.low %v477, %v479
        %v488 = vcombine.high %v477, %v479
        %v490 = vunpack.c.l.s4 1983009808
        %v491 = vunpack.c.0.s8 %v490
        %v492 = vlaneseq
        %v493 = vshrl.u32 %v492, 7
        %v494 = vsub.s32 %v491, %v493
        %v495 = vrot.slane %v485, %v494
        %v497 = vunpack.c.l.s4 1983009808
        %v498 = vunpack.c.0.s8 %v497
        %v499 = vlaneseq
        %v500 = vshrl.u32 %v499, 7
        %v501 = vsub.s32 %v498, %v500
        %v502 = vrot.slane %v486, %v501
        %v504 = vunpack.c.l.s4 1983009808
        %v505 = vunpack.c.0.s8 %v504
        %v506 = vlaneseq
        %v507 = vshrl.u32 %v506, 7
        %v508 = vsub.s32 %v505, %v507
        %v509 = vrot.slane %v487, %v508
        %v511 = vunpack.c.l.s4 1983009808
        %v512 = vunpack.c.0.s8 %v511
        %v513 = vlaneseq
        %v514 = vshrl.u32 %v513, 7
        %v515 = vsub.s32 %v512, %v514
        %v516 = vrot.slane %v488, %v515
        %v517 = vcombine.low %v495, %v509
        %v518 = vcombine.high %v495, %v509
        %v519 = vcombine.low %v502, %v516
        %v520 = vcombine.high %v502, %v516
        %v526 = vunpack.c.l.s4 1966171168
        %v527 = vunpack.c.0.s8 %v526
        %v528 = vlaneseq
        %v529 = vshrl.u32 %v528, 7
        %v530 = vsub.s32 %v527, %v529
        %v531 = vrot.slane %v517, %v530
        %v533 = vunpack.c.l.s4 1966171168
        %v534 = vunpack.c.0.s8 %v533
        %v535 = vlaneseq
        %v536 = vshrl.u32 %v535, 7
        %v537 = vsub.s32 %v534, %v536
        %v538 = vrot.slane %v518, %v537
        %v540 = vunpack.c.l.s4 1966171168
        %v541 = vunpack.c.0.s8 %v540
        %v542 = vlaneseq
        %v543 = vshrl.u32 %v542, 7
        %v544 = vsub.s32 %v541, %v543
        %v545 = vrot.slane %v519, %v544
        %v547 = vunpack.c.l.s4 1966171168
        %v548 = vunpack.c.0.s8 %v547
        %v549 = vlaneseq
        %v550 = vshrl.u32 %v549, 7
        %v551 = vsub.s32 %v548, %v550
        %v552 = vrot.slane %v520, %v551
        %v553 = vld [vmem:[%s278] sm:$0xff]
        %v554 = vld [vmem:[%s278 + $0x8] sm:$0xff]
        %v555 = vld [vmem:[%s278 + $0x10] sm:$0xff]
        %v556 = vld [vmem:[%s278 + $0x18] sm:$0xff]
        %v557 = vld [vmem:[%s278 + $0x20] sm:$0xff]
        %v558 = vld [vmem:[%s278 + $0x28] sm:$0xff]
        %v559 = vld [vmem:[%s278 + $0x30] sm:$0xff]
        %v560 = vld [vmem:[%s278 + $0x38] sm:$0xff]
        %v561 = vld [vmem:[%s278 + $0x40] sm:$0xff]
        %v562 = vld [vmem:[%s278 + $0x48] sm:$0xff]
        %v563 = vld [vmem:[%s278 + $0x50] sm:$0xff]
        %v564 = vld [vmem:[%s278 + $0x58] sm:$0xff]
        %v565 = vld [vmem:[%s278 + $0x60] sm:$0xff]
        %v566 = vld [vmem:[%s278 + $0x68] sm:$0xff]
        %v567 = vld [vmem:[%s278 + $0x70] sm:$0xff]
        %v568 = vld [vmem:[%s278 + $0x78] sm:$0xff]
        %569 = vmatprep.subr.mxu0 0.0
        %570 = vmatpush1.msra.mxu0 %v553
        %571 = vmatprep.subr.mxu0 0.0
        %572 = vmatpush1.msra.mxu0 %v554
        %573 = vmatprep.subr.mxu0 0.0
        %574 = vmatpush1.msra.mxu0 %v555
        %575 = vmatprep.subr.mxu0 0.0
        %576 = vmatpush1.msra.mxu0 %v556
        %577 = vmatprep.subr.mxu0 0.0
        %578 = vmatpush1.msra.mxu0 %v557
        %579 = vmatprep.subr.mxu0 0.0
        %580 = vmatpush1.msra.mxu0 %v558
        %581 = vmatprep.subr.mxu0 0.0
        %582 = vmatpush1.msra.mxu0 %v559
        %583 = vmatprep.subr.mxu0 0.0
        %584 = vmatpush1.msra.mxu0 %v560
        %585 = vmatprep.subr.mxu0 0.0
        %586 = vmatpush1.msra.mxu0 %v561
        %587 = vmatprep.subr.mxu0 0.0
        %588 = vmatpush1.msra.mxu0 %v562
        %589 = vmatprep.subr.mxu0 0.0
        %590 = vmatpush1.msra.mxu0 %v563
        %591 = vmatprep.subr.mxu0 0.0
        %592 = vmatpush1.msra.mxu0 %v564
        %593 = vmatprep.subr.mxu0 0.0
        %594 = vmatpush1.msra.mxu0 %v565
        %595 = vmatprep.subr.mxu0 0.0
        %596 = vmatpush1.msra.mxu0 %v566
        %597 = vmatprep.subr.mxu0 0.0
        %598 = vmatpush1.msra.mxu0 %v567
        %599 = vmatprep.subr.mxu0 0.0
        %600 = vmatpush1.msra.mxu0 %v568
        %601 = vmatprep.subr.mxu0 0.0
        %602 = vmatpush1.msra.mxu0 0.0
        %603 = vmatprep.subr.mxu0 0.0
        %604 = vmatpush1.msra.mxu0 0.0
        %605 = vmatprep.subr.mxu0 0.0
        %606 = vmatpush1.msra.mxu0 0.0
        %607 = vmatprep.subr.mxu0 0.0
        %608 = vmatpush1.msra.mxu0 0.0
        %609 = vmatprep.subr.mxu0 0.0
        %610 = vmatpush1.msra.mxu0 0.0
        %611 = vmatprep.subr.mxu0 0.0
        %612 = vmatpush1.msra.mxu0 0.0
        %613 = vmatprep.subr.mxu0 0.0
        %614 = vmatpush1.msra.mxu0 0.0
        %615 = vmatprep.subr.mxu0 0.0
        %616 = vmatpush1.msra.mxu0 0.0
        %617 = vmatprep.subr.mxu0 0.0
        %618 = vmatpush1.msra.mxu0 0.0
        %619 = vmatprep.subr.mxu0 0.0
        %620 = vmatpush1.msra.mxu0 0.0
        %621 = vmatprep.subr.mxu0 0.0
        %622 = vmatpush1.msra.mxu0 0.0
        %623 = vmatprep.subr.mxu0 0.0
        %624 = vmatpush1.msra.mxu0 0.0
        %625 = vmatprep.subr.mxu0 0.0
        %626 = vmatpush1.msra.mxu0 0.0
        %627 = vmatprep.subr.mxu0 0.0
        %628 = vmatpush1.msra.mxu0 0.0
        %629 = vmatprep.subr.mxu0 0.0
        %630 = vmatpush1.msra.mxu0 0.0
        %631 = vmatprep.subr.mxu0 0.0
        %632 = vmatpush1.msra.mxu0 0.0
        %633 = vmatprep.mubr.f32.mxu0 0.0
        %634 = vmatmul.mubr.f32.gmra.mrb[0].mxu0 %v531
        %v635 = vpop.f32.mrb[0].mxu0
        %v636 = vadd.f32 0.0, %v635
        %v637 = vpop.f32.mrb[0].mxu0
        %638 = vmatprep.mubr.f32.mxu0 0.0
        %639 = vmatmul.mubr.f32.gmra.mrb[0].mxu0 %v538
        %v640 = vpop.f32.mrb[0].mxu0
        %v641 = vadd.f32 0.0, %v640
        %v642 = vpop.f32.mrb[0].mxu0
        %643 = vmatprep.mubr.f32.mxu0 0.0
        %644 = vmatmul.mubr.f32.gmra.mrb[0].mxu0 %v545
        %v645 = vpop.f32.mrb[0].mxu0
        %v646 = vadd.f32 0.0, %v645
        %v647 = vpop.f32.mrb[0].mxu0
        %648 = vmatprep.mubr.f32.mxu0 0.0
        %649 = vmatmul.mubr.f32.gmra.mrb[0].mxu0 %v552
        %v650 = vpop.f32.mrb[0].mxu0
        %v651 = vadd.f32 0.0, %v650
        %v652 = vpop.f32.mrb[0].mxu0
        %653 = vdwg.mxu0
        %v658 = vcombine.high %v636, %v636
        %v659 = vcombine.high %v641, %v641
        %v660 = vcombine.high %v646, %v646
        %v661 = vcombine.high %v651, %v651
        %v666 = vld [vmem:[%s316] sm:$0xf]
        %668 = vset.pattern.permute.xlu0 0
        %669 = vperm.xlu0 %668, %v666
        %v670 = vpop.permute.xlu0 %669
        %v672 = vadd.f32 %v636, %v670
        %v673 = vadd.f32 %v658, %v670
        %v674 = vadd.f32 %v641, %v670
        %v675 = vadd.f32 %v659, %v670
        %v676 = vadd.f32 %v646, %v670
        %v677 = vadd.f32 %v660, %v670
        %v678 = vadd.f32 %v651, %v670
        %v679 = vadd.f32 %v661, %v670
        %680 = vst [vmem:[%s311] sm:$0xf] %v672
        %681 = vst [vmem:[%s311 + $0x4] sm:$0xf] %v673
        %682 = vst [vmem:[%s311 + $0x8] sm:$0xf] %v674
        %683 = vst [vmem:[%s311 + $0xc] sm:$0xf] %v675
        %684 = vst [vmem:[%s311 + $0x10] sm:$0xf] %v676
        %685 = vst [vmem:[%s311 + $0x14] sm:$0xf] %v677
        %686 = vst [vmem:[%s311 + $0x18] sm:$0xf] %v678
        %687 = vst [vmem:[%s311 + $0x1c] sm:$0xf] %v679
        %s688 = sand.u32 %s159, 1
        %s689 = scalar_lea.sflag [#allocation4], %s688
        %s690 = sand.u32 %s159, 1
        %s691 = smul.addr %s690, 32
        %s692 = scalar_lea.vmem [#allocation8], %s691
        // Predicated region
        $region49: #{tpu_custom_call.1} parent=35 // pred_check
          %p693 = pneg %p169
        $region50: #{tpu_custom_call.1} parent=35 // pred_check_branch
          %695 = sbr.rel (%p693) target = $region52
        $region51: #{tpu_custom_call.1} parent=35 // pred_region
          %s696 = smul.u32 8, %s28
          %s698 = ssub.s32 512, 512
          %699 = vsyncadd %s689, %s698
          %s700 = sadd.s32 %s29, %s696
          %s701 = smul.addr %s27, 8
          %s702 = sadd.s32 %s700, %s701
          %s703 = smul.addr %s702, 64
          %s704 = scalar_lea.hbm %s4, %s703
          %s705 = sshll.u32 %s692, 4
          %s706 = int_to_ptr.vmem [resolvable:$true] %s705
          %711 = dma.vmem_to_hbm [thread:$0]  %s706, 512, %s704, %s689, 64, 64, 4
        $region52: #{tpu_custom_call.1} parent=35 // pred_fallthru
          _
      $region36: #{tpu_custom_call.1} parent=5 // pred_fallthru
        _
      %p712 = scmp.le.s32.totalorder 2, %s17
      // Predicated region
      $region53: #{tpu_custom_call.1} parent=5 // pred_check
        %p713 = pneg %p712
      $region54: #{tpu_custom_call.1} parent=5 // pred_check_branch
        %715 = sbr.rel (%p713) target = $region56
      $region55: #{tpu_custom_call.1} parent=5 // pred_region
        %s716 = ssub.s32 %s17, 2
        // Predicated region
        $region57: #{tpu_custom_call.1} parent=55 // pred_check
          %p717 = pneg %p175
        $region58: #{tpu_custom_call.1} parent=55 // pred_check_branch
          %719 = sbr.rel (%p717) target = $region60
        $region59: #{tpu_custom_call.1} parent=55 // pred_region
          %s720 = sand.u32 %s160, 1
          %s721 = scalar_lea.sflag [#allocation4], %s720
          %s722 = sand.u32 %s160, 1
          %s723 = smul.addr %s722, 32
          %s724 = scalar_lea.vmem [#allocation8], %s723
          %725 = dma.done %s721, 512
        $region60: #{tpu_custom_call.1} parent=55 // pred_fallthru
          _
      $region56: #{tpu_custom_call.1} parent=5 // pred_fallthru
        _
    $region6: #{tpu_custom_call.1} parent=1 // loop_footer
      %s21 = sadd.s32 1, %s17
    $region7: #{tpu_custom_call.1} parent=1 // loop_footer_branch
      %16 = sbr.rel target = $region3
    $region8: #{tpu_custom_call.1} parent=1 // loop_exit
      _
    %726 = vsyncpa [#allocation3], 1
    %s727 = scalar_lea.sflag [#allocation3], 1
    %728 = vsyncpa %s727, 1
    %729 = vsyncpa [#allocation6], 1
    %730 = vsyncpa [#allocation4], 1
    %s731 = scalar_lea.sflag [#allocation4], 1
    %732 = vsyncpa %s731, 1

</llo_original>
